<compile_context>
chip_gen: v5e
topology: v5e:2x2
jax: 0.10.0
libtpu: 0.0.40
codegen_flags: <defaults>
</compile_context>

<pallas_src>
import functools
import math

import numpy as np
import jax
import jax.numpy as jnp
from jax.experimental import pallas as pl
from jax.experimental.pallas import tpu as pltpu


def _round_up(x, m):
    return ((x + m - 1) // m) * m


def _cdiv(a, b):
    return (a + b - 1) // b


# ----------------------------------------------------------------------------
# Kernels
# ----------------------------------------------------------------------------
def _linear_kernel_fullk(precision, x_ref, w_ref, b_ref, o_ref):
    """Whole K in VMEM: o = x @ w + b for one (tm, tn) output tile."""
    acc = jnp.dot(x_ref[...], w_ref[...],
                  preferred_element_type=jnp.float32,
                  precision=precision)
    o_ref[...] = (acc + b_ref[...]).astype(o_ref.dtype)


def _linear_kernel_ksplit(precision, x_ref, w_ref, b_ref, o_ref):
    """K split across the innermost grid axis; accumulate into the resident
    f32 output block (initialized to the broadcast bias at k == 0)."""
    @pl.when(pl.program_id(2) == 0)
    def _():
        o_ref[...] = jnp.broadcast_to(b_ref[...], o_ref.shape).astype(o_ref.dtype)

    o_ref[...] += jnp.dot(x_ref[...], w_ref[...],
                          preferred_element_type=jnp.float32,
                          precision=precision)


# ----------------------------------------------------------------------------
# Wrapper
# ----------------------------------------------------------------------------
def pallas_linear(x, w, b, *, compute_dtype=jnp.bfloat16):
    """y = x @ w + b  (equivalent to nn.Linear applied on the last dim).

    x: (..., K)           w: (K, N) (transpose of PyTorch's (N, K) weight)
    b: (N,)               returns (..., N) float32

    compute_dtype: jnp.bfloat16 (default, MXU-native, f32 accumulation) or
                   jnp.float32  (uses precision=HIGHEST for f32-exact matmul).
    """
    *lead, K = x.shape
    Kw, N = w.shape
    assert Kw == K, (Kw, K)
    M = int(np.prod(lead)) if lead else 1

    in_dtype = jnp.dtype(compute_dtype)
    in_bytes = in_dtype.itemsize
    precision = None if in_dtype == jnp.bfloat16 else jax.lax.Precision.HIGHEST

    # ---- Tile selection (v7x-safe caps; big enough to amortize grid-step
    # overhead and HBM re-streaming on all generations). -----------------------
    sub = 16 if in_dtype == jnp.bfloat16 else 8     # sublane quantum
    tm = min(512, _round_up(M, sub))
    tn = min(1024, _round_up(N, 128))

    # Keep >=2 parallel output blocks when possible so v7x's two TensorCores
    # (and megacore-parallel axes generally) both get work.
    if _cdiv(M, tm) * _cdiv(N, tn) < 2:
        if M >= 2 * sub:
            tm = _round_up(_cdiv(M, 2), sub)
        elif N >= 256:
            tn = _round_up(_cdiv(N, 2), 128)

    Kp_lane = _round_up(K, 128)

    # Full-K slab path if the double-buffered (x-slab + w-slab) + output fits a
    # v7x-safe VMEM budget; otherwise split K over an "arbitrary" grid axis.
    fullk_bytes = (2 * (tm * Kp_lane + Kp_lane * tn) * in_bytes
                   + 2 * tm * tn * 4 + 2 * tn * 4)
    use_fullk = fullk_bytes <= (24 << 20)

    if use_fullk:
        tk = Kp_lane
        Kp = Kp_lane
    else:
        tk = min(2048, Kp_lane)
        Kp = _round_up(K, tk)

    Mp = _round_up(M, tm)
    Np = _round_up(N, tn)

    # ---- Prepare operands (pad only dims that actually need it). -------------
    # TODO(synk): in a stateful module, pad/cast w and b once at init time.
    x2 = x.reshape(M, K).astype(in_dtype)
    w2 = w.astype(in_dtype)
    b2 = b.reshape(1, N).astype(jnp.float32)
    if Mp != M or Kp != K:
        x2 = jnp.pad(x2, ((0, Mp - M), (0, Kp - K)))
    if Kp != K or Np != N:
        w2 = jnp.pad(w2, ((0, Kp - K), (0, Np - N)))   # zero K-rows add nothing
    if Np != N:
        b2 = jnp.pad(b2, ((0, 0), (0, Np - N)))

    # ---- VMEM budget & cost hint. --------------------------------------------
    est = (2 * (tm * tk * in_bytes + tk * tn * in_bytes + tn * 4)
           + 2 * tm * tn * 4)
    vmem_limit = int(min(48 << 20, max(32 << 20, 2 * est)))

    cost = pl.CostEstimate(
        flops=2 * M * N * K,
        transcendentals=0,
        bytes_accessed=M * K * in_bytes + K * N * in_bytes + M * N * 4 + N * 4,
    )

    if use_fullk:
        # grid = (N-blocks, M-blocks): the w/bias block index is constant across
        # the inner M axis, so each weight column block is DMA'd once per N block.
        grid = (Np // tn, Mp // tm)
        out = pl.pallas_call(
            functools.partial(_linear_kernel_fullk, precision),
            out_shape=jax.ShapeDtypeStruct((Mp, Np), jnp.float32),
            grid_spec=pltpu.PrefetchScalarGridSpec(
                num_scalar_prefetch=0,
                grid=grid,
                in_specs=[
                    pl.BlockSpec((tm, Kp), lambda j, i: (i, 0)),   # x slab
                    pl.BlockSpec((Kp, tn), lambda j, i: (0, j)),   # w slab (reused over i)
                    pl.BlockSpec((1, tn), lambda j, i: (0, j)),    # bias row
                ],
                out_specs=pl.BlockSpec((tm, tn), lambda j, i: (i, j)),
            ),
            compiler_params=pltpu.CompilerParams(
                dimension_semantics=("parallel", "parallel"),
                vmem_limit_bytes=vmem_limit),
            cost_estimate=cost,
        )(x2, w2, b2)
    else:
        grid = (Mp // tm, Np // tn, Kp // tk)
        out = pl.pallas_call(
            functools.partial(_linear_kernel_ksplit, precision),
            out_shape=jax.ShapeDtypeStruct((Mp, Np), jnp.float32),
            grid_spec=pltpu.PrefetchScalarGridSpec(
                num_scalar_prefetch=0,
                grid=grid,
                in_specs=[
                    pl.BlockSpec((tm, tk), lambda i, j, k: (i, k)),   # x tile
                    pl.BlockSpec((tk, tn), lambda i, j, k: (k, j)),   # w tile
                    pl.BlockSpec((1, tn), lambda i, j, k: (0, j)),    # bias row
                ],
                out_specs=pl.BlockSpec((tm, tn), lambda i, j, k: (i, j)),
            ),
            compiler_params=pltpu.CompilerParams(
                dimension_semantics=("parallel", "parallel", "arbitrary"),
                vmem_limit_bytes=vmem_limit),
            cost_estimate=cost,
        )(x2, w2, b2)

    out = out[:M, :N]
    return out.reshape(*lead, N) if lead else out.reshape(N)


if __name__ == "__main__":
    # Small but representative shapes: batch=2, seq=192, in_dim=256, out_dim=256.
    B, T, IN, OUT = 2, 192, 256, 256

    key = jax.random.PRNGKey(0)
    kx, kw, kb = jax.random.split(key, 3)

    x = jax.random.normal(kx, (B, T, IN), jnp.float32)

    # Xavier-uniform init, gain('linear') = 1.0 (matches nn.init.xavier_uniform_).
    # PyTorch stores weight as (OUT, IN); we store its transpose (IN, OUT) so the
    # kernel computes x @ W directly — mathematically identical to x @ W_pt.T.
    bound = math.sqrt(6.0 / (IN + OUT))
    w = jax.random.uniform(kw, (IN, OUT), jnp.float32, -bound, bound)

    # nn.Linear default bias init: U(-1/sqrt(fan_in), 1/sqrt(fan_in)).
    bb = 1.0 / math.sqrt(IN)
    b = jax.random.uniform(kb, (OUT,), jnp.float32, -bb, bb)

    y = pallas_linear(x, w, b)            # bf16 operands, f32 accumulation
    jax.block_until_ready(y)

    # Reference check (host numpy, f32). Tolerance accounts for bf16 operands.
    ref = np.asarray(x).reshape(-1, IN) @ np.asarray(w) + np.asarray(b)
    ref = ref.reshape(B, T, OUT)
    assert y.shape == (B, T, OUT)
    np.testing.assert_allclose(np.asarray(y), ref, rtol=2e-2, atol=2e-2)

    print("KERNEL_OK")
</pallas_src>

<mosaic_0001>
module attributes {stable_mosaic.version = 11 : i64} {
  func.func @_linear_kernel_fullk(%arg0: i32, %arg1: i32, %arg2: memref<192x256xbf16, #tpu.memory_space<vmem>>, %arg3: memref<256x256xbf16, #tpu.memory_space<vmem>>, %arg4: memref<1x256xf32, #tpu.memory_space<vmem>>, %arg5: memref<192x256xf32, #tpu.memory_space<vmem>>) attributes {dimension_semantics = [#tpu.dimension_semantics<parallel>, #tpu.dimension_semantics<parallel>], iteration_bounds = array<i64: 1, 2>, scalar_prefetch = 0 : i64, scratch_operands = 0 : i64, tpu.core_type = #tpu.core_type<tc>, window_params = [{transform_indices = @transform_0, window_bounds = array<i64: 192, 256>}, {transform_indices = @transform_1, window_bounds = array<i64: 256, 256>}, {transform_indices = @transform_2, window_bounds = array<i64: 1, 256>}, {transform_indices = @transform_3, window_bounds = array<i64: 192, 256>}]} {
    %c0 = arith.constant 0 : index
    %c0_0 = arith.constant 0 : index
    %0 = vector.load %arg2[%c0, %c0_0] : memref<192x256xbf16, #tpu.memory_space<vmem>>, vector<192x256xbf16>
    %c0_1 = arith.constant 0 : index
    %c0_2 = arith.constant 0 : index
    %1 = vector.load %arg3[%c0_1, %c0_2] : memref<256x256xbf16, #tpu.memory_space<vmem>>, vector<256x256xbf16>
    %cst = arith.constant dense<0.000000e+00> : vector<192x256xf32>
    %2 = tpu.matmul %0, %1, %cst {dimension_numbers = #tpu.dot_dimension_numbers<[1], [0], [0], [1], [0, 0, 1, 1], [], []>} : vector<192x256xbf16>, vector<256x256xbf16>, vector<192x256xf32> -> vector<192x256xf32>
    %c0_3 = arith.constant 0 : index
    %c0_4 = arith.constant 0 : index
    %3 = vector.load %arg4[%c0_3, %c0_4] : memref<1x256xf32, #tpu.memory_space<vmem>>, vector<1x256xf32>
    %4 = vector.broadcast %3 : vector<1x256xf32> to vector<192x256xf32>
    %5 = arith.addf %2, %4 : vector<192x256xf32>
    %c0_5 = arith.constant 0 : index
    %c0_6 = arith.constant 0 : index
    %6 = vector.load %arg5[%c0_5, %c0_6] : memref<192x256xf32, #tpu.memory_space<vmem>>, vector<192x256xf32>
    tpu.vector_store %arg5[%c0_5, %c0_6], %5 {strides = array<i32>} : memref<192x256xf32, #tpu.memory_space<vmem>>, vector<192x256xf32>,
    return
  }
  func.func @transform_0(%arg0: i32, %arg1: i32) -> (i32, i32) {
    %c0_i32 = arith.constant 0 : i32
    %c0_i32_0 = arith.constant 0 : i32
    return %arg1, %c0_i32 : i32, i32
  }
  func.func @transform_1(%arg0: i32, %arg1: i32) -> (i32, i32) {
    %c0_i32 = arith.constant 0 : i32
    %c0_i32_0 = arith.constant 0 : i32
    return %c0_i32, %arg0 : i32, i32
  }
  func.func @transform_2(%arg0: i32, %arg1: i32) -> (i32, i32) {
    %c0_i32 = arith.constant 0 : i32
    %c0_i32_0 = arith.constant 0 : i32
    return %c0_i32, %arg0 : i32, i32
  }
  func.func @transform_3(%arg0: i32, %arg1: i32) -> (i32, i32) {
    %c0_i32 = arith.constant 0 : i32
    return %arg1, %arg0 : i32, i32
  }
}

</mosaic_0001>

<llo_original>
// kernel: tpu_custom_call.1
$region0: #{tpu_custom_call.1}
  #allocation0 [shape = 'u32[]', space=smem, size = 0x4, offset = 0x4, fixed_abs, tag = 'smem constant byte address 0x4 - core index']
  #allocation1 [shape = 'u32[72,128]{1,0:T(1,128)}', space=vmem, size = 0x9000, scoped, tag = 'internal scratch']
  %s0 = inlined_call_operand.hbm [shape: bf16[384,256], index: 0, kind: input, shape index: {}]
  %s1 = inlined_call_operand.hbm [shape: bf16[256,256], index: 1, kind: input, shape index: {}]
  %s2 = inlined_call_operand.hbm [shape: f32[1,256], index: 2, kind: input, shape index: {}]
  %s3 = inlined_call_operand.hbm [shape: f32[384,256], index: 3, kind: output, shape index: {}]
  %s4 = sld [smem:[#allocation0]]
  $region57: #{tpu_custom_call.1} parent=0
    _
  %s6 = ssub.s32 1, %s4
  %s7 = scalar_select 0, %s6, %s4
  $region1: #{tpu_custom_call.1} parent=0
    #allocation2 [shape = 'u8[196608]{0}', space=vmem, size = 0x30000, scoped, tag = 'input window, operand 0']
    #allocation3 [shape = 's32[2]{0}', space=sflag, size = 0x8, scoped, tag = 'scoped memory for tpu_custom_call.1']
    #allocation4 [shape = 's32[2]{0}', space=sflag, size = 0x8, scoped, tag = 'scoped memory for tpu_custom_call.1']
    #allocation5 [shape = 'u8[131072]{0}', space=vmem, size = 0x20000, scoped, tag = 'input window, operand 1, single buffered']
    #allocation6 [shape = 's32[1]{0}', space=sflag, size = 0x4, scoped, tag = 'scoped memory for tpu_custom_call.1']
    #allocation7 [shape = 'u8[1024]{0}', space=vmem, size = 0x400, scoped, tag = 'input window, operand 2, single buffered']
    #allocation8 [shape = 'u8[393216]{0}', space=vmem, size = 0x60000, scoped, tag = 'output window, operand 0']
    %8 = vsyncpa [#allocation3], 0
    %s9 = scalar_lea.sflag [#allocation3], 1
    %10 = vsyncpa %s9, 0
    %11 = vsyncpa [#allocation6], 0
    %12 = vsyncpa [#allocation4], 0
    %s13 = scalar_lea.sflag [#allocation4], 1
    %14 = vsyncpa %s13, 0
    loop: start=0, step=1, limit=4
    $region2: #{tpu_custom_call.1} parent=1 // loop_pre_header
      _
    $region3: #{tpu_custom_call.1} parent=1 // loop_header
      %s16 = sphi 0, %s20
      %p17 = scmp.ge.s32.totalorder %s16, 4
      %s23 = sphi 0, %s35
      %s24 = sphi 0, %s31
      %s25 = sphi 0, %s23
      %s26 = sphi 0, %s24
      %s27 = sphi 0, %s25
      %s28 = sphi 0, %s26
      %s38 = sphi 0, %s40
      %s41 = sphi 0, %s38
      %s42 = sphi 0, %s41
      %s58 = sphi 0, %s42
      %s64 = sphi 0, %s66
      %s67 = sphi 0, %s64
      %s68 = sphi 0, %s67
      %s84 = sphi 0, %s68
      %s90 = sphi 0, %s92
      %s93 = sphi 0, %s90
      %s94 = sphi 0, %s93
      %s110 = sphi 0, %s94
      %s118 = sphi 0, %s120
      %s121 = sphi 0, %s118
      %s122 = sphi 0, %s121
      %s138 = sphi 0, %s122
    $region4: #{tpu_custom_call.1} parent=1 // loop_header_branch
      %19 = sbr.rel (%p17) target = $region8
    $region5: #{tpu_custom_call.1} parent=1 // loop_body
      %s21 = ssub.s32 %s16, 1
      %s22 = ssub.s32 %s16, 2
      %s29 = sadd.s32 1, %s24
      %p30 = scmp.ge.s32.totalorder %s29, 2
      %s31 = scalar_select %p30, 0, %s29
      %s32 = sadd.s32 1, %s23
      %s33 = scalar_select %p30, %s32, %s23
      %p34 = scmp.ge.s32.totalorder %s33, 1
      %s35 = scalar_select %p34, 0, %s33
      %s36 = ssub.s32 %s24, %s31
      %p37 = scmp.eq.s32.totalorder %s36, 0
      %s39 = sadd.s32 %s38, 1
      %s40 = scalar_select %p37, %s38, %s39
      %p43 = pneg %p37
      %p44 = scmp.eq.s32.totalorder %s16, 1
      %p45 = por %p43, %p44
      %p46 = scmp.ne.s32.totalorder %s38, %s41
      %p47 = scmp.eq.s32.totalorder %s16, 0
      %p48 = por %p46, %p47
      %p49 = scmp.ne.s32.totalorder %s38, %s41
      %p50 = scmp.eq.s32.totalorder %s21, 1
      %p51 = por %p49, %p50
      %p52 = scmp.ne.s32.totalorder %s41, %s42
      %p53 = scmp.eq.s32.totalorder %s21, 0
      %p54 = por %p52, %p53
      %p55 = scmp.ne.s32.totalorder %s41, %s42
      %p56 = scmp.eq.s32.totalorder %s22, 1
      %p57 = por %p55, %p56
      %p59 = scmp.ne.s32.totalorder %s42, %s58
      %p60 = scmp.eq.s32.totalorder %s22, 0
      %p61 = por %p59, %p60
      %s62 = ssub.s32 %s23, %s35
      %p63 = scmp.eq.s32.totalorder %s62, 0
      %s65 = sadd.s32 %s64, 1
      %s66 = scalar_select %p63, %s64, %s65
      %p69 = pneg %p63
      %p70 = scmp.eq.s32.totalorder %s16, 1
      %p71 = por %p69, %p70
      %p72 = scmp.ne.s32.totalorder %s64, %s67
      %p73 = scmp.eq.s32.totalorder %s16, 0
      %p74 = por %p72, %p73
      %p75 = scmp.ne.s32.totalorder %s64, %s67
      %p76 = scmp.eq.s32.totalorder %s21, 1
      %p77 = por %p75, %p76
      %p78 = scmp.ne.s32.totalorder %s67, %s68
      %p79 = scmp.eq.s32.totalorder %s21, 0
      %p80 = por %p78, %p79
      %p81 = scmp.ne.s32.totalorder %s67, %s68
      %p82 = scmp.eq.s32.totalorder %s22, 1
      %p83 = por %p81, %p82
      %p85 = scmp.ne.s32.totalorder %s68, %s84
      %p86 = scmp.eq.s32.totalorder %s22, 0
      %p87 = por %p85, %p86
      %s88 = ssub.s32 %s23, %s35
      %p89 = scmp.eq.s32.totalorder %s88, 0
      %s91 = sadd.s32 %s90, 1
      %s92 = scalar_select %p89, %s90, %s91
      %p95 = pneg %p89
      %p96 = scmp.eq.s32.totalorder %s16, 1
      %p97 = por %p95, %p96
      %p98 = scmp.ne.s32.totalorder %s90, %s93
      %p99 = scmp.eq.s32.totalorder %s16, 0
      %p100 = por %p98, %p99
      %p101 = scmp.ne.s32.totalorder %s90, %s93
      %p102 = scmp.eq.s32.totalorder %s21, 1
      %p103 = por %p101, %p102
      %p104 = scmp.ne.s32.totalorder %s93, %s94
      %p105 = scmp.eq.s32.totalorder %s21, 0
      %p106 = por %p104, %p105
      %p107 = scmp.ne.s32.totalorder %s93, %s94
      %p108 = scmp.eq.s32.totalorder %s22, 1
      %p109 = por %p107, %p108
      %p111 = scmp.ne.s32.totalorder %s94, %s110
      %p112 = scmp.eq.s32.totalorder %s22, 0
      %p113 = por %p111, %p112
      %s114 = ssub.s32 %s24, %s31
      %s115 = ssub.s32 %s23, %s35
      %s116 = sor.u32 %s114, %s115
      %p117 = scmp.eq.s32.totalorder %s116, 0
      %s119 = sadd.s32 %s118, 1
      %s120 = scalar_select %p117, %s118, %s119
      %p123 = pneg %p117
      %p124 = scmp.eq.s32.totalorder %s16, 1
      %p125 = por %p123, %p124
      %p126 = scmp.ne.s32.totalorder %s118, %s121
      %p127 = scmp.eq.s32.totalorder %s16, 0
      %p128 = por %p126, %p127
      %p129 = scmp.ne.s32.totalorder %s118, %s121
      %p130 = scmp.eq.s32.totalorder %s21, 1
      %p131 = por %p129, %p130
      %p132 = scmp.ne.s32.totalorder %s121, %s122
      %p133 = scmp.eq.s32.totalorder %s21, 0
      %p134 = por %p132, %p133
      %p135 = scmp.ne.s32.totalorder %s121, %s122
      %p136 = scmp.eq.s32.totalorder %s22, 1
      %p137 = por %p135, %p136
      %p139 = scmp.ne.s32.totalorder %s122, %s138
      %p140 = scmp.eq.s32.totalorder %s22, 0
      %p141 = por %p139, %p140
      %p142 = scmp.le.s32.totalorder 1, %s16
      %p143 = scmp.lt.s32.totalorder %s16, 3
      %p144 = pnand %p142, %p143
      %p145 = pneg %p144
      // Predicated region
      $region9: #{tpu_custom_call.1} parent=5 // pred_check
        _
      $region10: #{tpu_custom_call.1} parent=5 // pred_check_branch
        %147 = sbr.rel (%p144) target = $region12
      $region11: #{tpu_custom_call.1} parent=5 // pred_region
        %s148 = ssub.s32 %s16, 1
        // Predicated region
        $region13: #{tpu_custom_call.1} parent=11 // pred_check
          %p149 = pneg %p80
        $region14: #{tpu_custom_call.1} parent=11 // pred_check_branch
          %151 = sbr.rel (%p149) target = $region16
        $region15: #{tpu_custom_call.1} parent=11 // pred_region
          %s152 = smul.u32 2, %s25
          %154 = vsyncadd [#allocation6], 0
          %s155 = smul.addr %s152, 4
          %s156 = scalar_lea.hbm %s1, %s155
          %s157 = sshll.u32 %s156, 4
          %s158 = int_to_ptr.hbm [resolvable:$true] %s157
          %s159 = sshll.u32 [#allocation5], 4
          %s160 = int_to_ptr.vmem [resolvable:$true] %s159
          %165 = dma.hbm_to_vmem [thread:$0]  %s158, 4096, %s160, [#allocation6], 128, 128, 8
        $region16: #{tpu_custom_call.1} parent=11 // pred_fallthru
          _
        // Predicated region
        $region17: #{tpu_custom_call.1} parent=11 // pred_check
          %p166 = pneg %p106
        $region18: #{tpu_custom_call.1} parent=11 // pred_check_branch
          %168 = sbr.rel (%p166) target = $region20
        $region19: #{tpu_custom_call.1} parent=11 // pred_region
          %s169 = smul.u32 2, %s25
          %171 = vsyncadd [#allocation6], 0
          %s172 = scalar_lea.hbm %s2, %s169
          %s174 = sshll.u32 %s172, 4
          %s175 = int_to_ptr.hbm [resolvable:$true] %s174
          %s176 = sshll.u32 [#allocation7], 4
          %s177 = int_to_ptr.vmem [resolvable:$true] %s176
          %179 = dma.hbm_to_vmem [thread:$0]  %s175, 32, %s177, [#allocation6]
        $region20: #{tpu_custom_call.1} parent=11 // pred_fallthru
          _
      $region12: #{tpu_custom_call.1} parent=5 // pred_fallthru
        _
      %p180 = scmp.lt.s32.totalorder %s16, 2
      // Predicated region
      $region21: #{tpu_custom_call.1} parent=5 // pred_check
        %p181 = pneg %p180
      $region22: #{tpu_custom_call.1} parent=5 // pred_check_branch
        %183 = sbr.rel (%p181) target = $region24
      $region23: #{tpu_custom_call.1} parent=5 // pred_region
        // Predicated region
        $region25: #{tpu_custom_call.1} parent=23 // pred_check
          %p184 = pneg %p48
        $region26: #{tpu_custom_call.1} parent=23 // pred_check_branch
          %186 = sbr.rel (%p184) target = $region28
        $region27: #{tpu_custom_call.1} parent=23 // pred_region
          %s187 = sand.u32 %s38, 1
          %s188 = scalar_lea.sflag [#allocation3], %s187
          %s189 = sand.u32 %s38, 1
          %s190 = smul.addr %s189, 192
          %s191 = scalar_lea.vmem [#allocation2], %s190
          %s192 = smul.u32 24, %s24
          %194 = vsyncadd %s188, 0
          %s195 = smul.addr %s192, 2
          %s196 = smul.addr %s195, 4
          %s197 = scalar_lea.hbm %s0, %s196
          %s198 = sshll.u32 %s197, 4
          %s199 = int_to_ptr.hbm [resolvable:$true] %s198
          %s200 = sshll.u32 %s191, 4
          %s201 = int_to_ptr.vmem [resolvable:$true] %s200
          %206 = dma.hbm_to_vmem [thread:$0]  %s199, 3072, %s201, %s188, 128, 128, 8
        $region28: #{tpu_custom_call.1} parent=23 // pred_fallthru
          _
      $region24: #{tpu_custom_call.1} parent=5 // pred_fallthru
        _
      %p207 = scmp.le.s32.totalorder 1, %s16
      %p208 = scmp.lt.s32.totalorder %s16, 3
      %p209 = pnand %p207, %p208
      %p210 = pneg %p209
      // Predicated region
      $region29: #{tpu_custom_call.1} parent=5 // pred_check
        _
      $region30: #{tpu_custom_call.1} parent=5 // pred_check_branch
        %212 = sbr.rel (%p209) target = $region32
      $region31: #{tpu_custom_call.1} parent=5 // pred_region
        %s213 = ssub.s32 %s16, 1
        %s214 = sand.u32 %s41, 1
        %s215 = scalar_lea.sflag [#allocation3], %s214
        %s216 = sand.u32 %s41, 1
        %s217 = smul.addr %s216, 192
        %s218 = scalar_lea.vmem [#allocation2], %s217
        // Predicated region
        $region33: #{tpu_custom_call.1} parent=31 // pred_check
          %p219 = pneg %p54
        $region34: #{tpu_custom_call.1} parent=31 // pred_check_branch
          %221 = sbr.rel (%p219) target = $region36
        $region35: #{tpu_custom_call.1} parent=31 // pred_region
          %223 = dma.done %s215, 3072
        $region36: #{tpu_custom_call.1} parent=31 // pred_fallthru
          _
        // Predicated region
        $region37: #{tpu_custom_call.1} parent=31 // pred_check
          %p224 = pneg %p80
        $region38: #{tpu_custom_call.1} parent=31 // pred_check_branch
          %226 = sbr.rel (%p224) target = $region40
        $region39: #{tpu_custom_call.1} parent=31 // pred_region
          %228 = dma.done [#allocation6], 4096
        $region40: #{tpu_custom_call.1} parent=31 // pred_fallthru
          _
        // Predicated region
        $region41: #{tpu_custom_call.1} parent=31 // pred_check
          %p229 = pneg %p106
        $region42: #{tpu_custom_call.1} parent=31 // pred_check_branch
          %231 = sbr.rel (%p229) target = $region44
        $region43: #{tpu_custom_call.1} parent=31 // pred_region
          %233 = dma.done [#allocation6], 32
        $region44: #{tpu_custom_call.1} parent=31 // pred_fallthru
          _
        %s234 = sand.u32 %s41, 1
        %s235 = scalar_lea.sflag [#allocation3], %s234
        %s236 = sand.u32 %s41, 1
        %s237 = smul.addr %s236, 192
        %s238 = scalar_lea.vmem [#allocation2], %s237
        %p239 = pneg %p54
        %p240 = pneg %p51
        %p241 = pneg %p80
        %p242 = pneg %p77
        %p243 = pneg %p106
        %p244 = pneg %p103
        %p245 = pneg %p134
        %p246 = pneg %p131
        %s247 = sand.u32 %s121, 1
        %s248 = scalar_lea.sflag [#allocation4], %s247
        %s249 = sand.u32 %s121, 1
        %s250 = smul.addr %s249, 384
        %s251 = scalar_lea.vmem [#allocation8], %s250
        %s252 = smul.u32 24, %s26
        %s253 = smul.u32 2, %s25
        %s254 = smul.u32 2, %s25
        %s255 = smul.u32 24, %s26
        %s256 = smul.u32 2, %s25
        %v257 = vld [vmem:[%s218] sm:$0xff]
        %v258 = vld [vmem:[%s218 + $0x8] sm:$0xff]
        %v259 = vld [vmem:[%s218 + $0x10] sm:$0xff]
        %v260 = vld [vmem:[%s218 + $0x18] sm:$0xff]
        %v261 = vld [vmem:[%s218 + $0x20] sm:$0xff]
        %v262 = vld [vmem:[%s218 + $0x28] sm:$0xff]
        %v263 = vld [vmem:[%s218 + $0x30] sm:$0xff]
        %v264 = vld [vmem:[%s218 + $0x38] sm:$0xff]
        %v265 = vld [vmem:[%s218 + $0x40] sm:$0xff]
        %v266 = vld [vmem:[%s218 + $0x48] sm:$0xff]
        %v267 = vld [vmem:[%s218 + $0x50] sm:$0xff]
        %v268 = vld [vmem:[%s218 + $0x58] sm:$0xff]
        %v269 = vld [vmem:[%s218 + $0x60] sm:$0xff]
        %v270 = vld [vmem:[%s218 + $0x68] sm:$0xff]
        %v271 = vld [vmem:[%s218 + $0x70] sm:$0xff]
        %v272 = vld [vmem:[%s218 + $0x78] sm:$0xff]
        %v273 = vld [vmem:[%s218 + $0x80] sm:$0xff]
        %v274 = vld [vmem:[%s218 + $0x88] sm:$0xff]
        %v275 = vld [vmem:[%s218 + $0x90] sm:$0xff]
        %v276 = vld [vmem:[%s218 + $0x98] sm:$0xff]
        %v277 = vld [vmem:[%s218 + $0xa0] sm:$0xff]
        %v278 = vld [vmem:[%s218 + $0xa8] sm:$0xff]
        %v279 = vld [vmem:[%s218 + $0xb0] sm:$0xff]
        %v280 = vld [vmem:[%s218 + $0xb8] sm:$0xff]
        %v281 = vld [vmem:[#allocation5] sm:$0xff]
        %v282 = vld [vmem:[#allocation5 + $0x8] sm:$0xff]
        %v283 = vld [vmem:[#allocation5 + $0x10] sm:$0xff]
        %v284 = vld [vmem:[#allocation5 + $0x18] sm:$0xff]
        %v285 = vld [vmem:[#allocation5 + $0x20] sm:$0xff]
        %v286 = vld [vmem:[#allocation5 + $0x28] sm:$0xff]
        %v287 = vld [vmem:[#allocation5 + $0x30] sm:$0xff]
        %v288 = vld [vmem:[#allocation5 + $0x38] sm:$0xff]
        %v289 = vld [vmem:[#allocation5 + $0x40] sm:$0xff]
        %v290 = vld [vmem:[#allocation5 + $0x48] sm:$0xff]
        %v291 = vld [vmem:[#allocation5 + $0x50] sm:$0xff]
        %v292 = vld [vmem:[#allocation5 + $0x58] sm:$0xff]
        %v293 = vld [vmem:[#allocation5 + $0x60] sm:$0xff]
        %v294 = vld [vmem:[#allocation5 + $0x68] sm:$0xff]
        %v295 = vld [vmem:[#allocation5 + $0x70] sm:$0xff]
        %v296 = vld [vmem:[#allocation5 + $0x78] sm:$0xff]
        %v297 = vld [vmem:[#allocation5 + $0x80] sm:$0xff]
        %v298 = vld [vmem:[#allocation5 + $0x88] sm:$0xff]
        %v299 = vld [vmem:[#allocation5 + $0x90] sm:$0xff]
        %v300 = vld [vmem:[#allocation5 + $0x98] sm:$0xff]
        %v301 = vld [vmem:[#allocation5 + $0xa0] sm:$0xff]
        %v302 = vld [vmem:[#allocation5 + $0xa8] sm:$0xff]
        %v303 = vld [vmem:[#allocation5 + $0xb0] sm:$0xff]
        %v304 = vld [vmem:[#allocation5 + $0xb8] sm:$0xff]
        %v305 = vld [vmem:[#allocation5 + $0xc0] sm:$0xff]
        %v306 = vld [vmem:[#allocation5 + $0xc8] sm:$0xff]
        %v307 = vld [vmem:[#allocation5 + $0xd0] sm:$0xff]
        %v308 = vld [vmem:[#allocation5 + $0xd8] sm:$0xff]
        %v309 = vld [vmem:[#allocation5 + $0xe0] sm:$0xff]
        %v310 = vld [vmem:[#allocation5 + $0xe8] sm:$0xff]
        %v311 = vld [vmem:[#allocation5 + $0xf0] sm:$0xff]
        %v312 = vld [vmem:[#allocation5 + $0xf8] sm:$0xff]
        %v313 = vld [vmem:[#allocation7] sm:$0x3]
        %v315 = vperm.slane %v313, 0
        %v316 = vperm.slane %v313, 1
        %v343 = vunpack.c.l.b16 %v257
        %v344 = vunpack.c.h.b16 %v257
        %v345 = vunpack.c.l.b16 %v258
        %v346 = vunpack.c.h.b16 %v258
        %v347 = vunpack.c.l.b16 %v259
        %v348 = vunpack.c.h.b16 %v259
        %v349 = vunpack.c.l.b16 %v260
        %v350 = vunpack.c.h.b16 %v260
        %v351 = vunpack.c.l.b16 %v261
        %v352 = vunpack.c.h.b16 %v261
        %v353 = vunpack.c.l.b16 %v262
        %v354 = vunpack.c.h.b16 %v262
        %v355 = vunpack.c.l.b16 %v263
        %v356 = vunpack.c.h.b16 %v263
        %v357 = vunpack.c.l.b16 %v264
        %v358 = vunpack.c.h.b16 %v264
        %v359 = vunpack.c.l.b16 %v265
        %v360 = vunpack.c.h.b16 %v265
        %v361 = vunpack.c.l.b16 %v266
        %v362 = vunpack.c.h.b16 %v266
        %v363 = vunpack.c.l.b16 %v267
        %v364 = vunpack.c.h.b16 %v267
        %v365 = vunpack.c.l.b16 %v268
        %v366 = vunpack.c.h.b16 %v268
        %v367 = vunpack.c.l.b16 %v269
        %v368 = vunpack.c.h.b16 %v269
        %v369 = vunpack.c.l.b16 %v270
        %v370 = vunpack.c.h.b16 %v270
        %v371 = vunpack.c.l.b16 %v271
        %v372 = vunpack.c.h.b16 %v271
        %v373 = vunpack.c.l.b16 %v272
        %v374 = vunpack.c.h.b16 %v272
        %v375 = vunpack.c.l.b16 %v273
        %v376 = vunpack.c.h.b16 %v273
        %v377 = vunpack.c.l.b16 %v274
        %v378 = vunpack.c.h.b16 %v274
        %v379 = vunpack.c.l.b16 %v275
        %v380 = vunpack.c.h.b16 %v275
        %v381 = vunpack.c.l.b16 %v276
        %v382 = vunpack.c.h.b16 %v276
        %v383 = vunpack.c.l.b16 %v277
        %v384 = vunpack.c.h.b16 %v277
        %v385 = vunpack.c.l.b16 %v278
        %v386 = vunpack.c.h.b16 %v278
        %v387 = vunpack.c.l.b16 %v279
        %v388 = vunpack.c.h.b16 %v279
        %v389 = vunpack.c.l.b16 %v280
        %v390 = vunpack.c.h.b16 %v280
        %v391 = vpack.c.b16 %v345, %v343
        %v392 = vpack.c.b16 %v346, %v344
        %v393 = vpack.c.b16 %v349, %v347
        %v394 = vpack.c.b16 %v350, %v348
        %v395 = vpack.c.b16 %v353, %v351
        %v396 = vpack.c.b16 %v354, %v352
        %v397 = vpack.c.b16 %v357, %v355
        %v398 = vpack.c.b16 %v358, %v356
        %v399 = vpack.c.b16 %v361, %v359
        %v400 = vpack.c.b16 %v362, %v360
        %v401 = vpack.c.b16 %v365, %v363
        %v402 = vpack.c.b16 %v366, %v364
        %v403 = vpack.c.b16 %v369, %v367
        %v404 = vpack.c.b16 %v370, %v368
        %v405 = vpack.c.b16 %v373, %v371
        %v406 = vpack.c.b16 %v374, %v372
        %v407 = vpack.c.b16 %v377, %v375
        %v408 = vpack.c.b16 %v378, %v376
        %v409 = vpack.c.b16 %v381, %v379
        %v410 = vpack.c.b16 %v382, %v380
        %v411 = vpack.c.b16 %v385, %v383
        %v412 = vpack.c.b16 %v386, %v384
        %v413 = vpack.c.b16 %v389, %v387
        %v414 = vpack.c.b16 %v390, %v388
        %v471 = vunpack.c.l.b16 %v281
        %v472 = vunpack.c.h.b16 %v281
        %v473 = vunpack.c.l.b16 %v282
        %v474 = vunpack.c.h.b16 %v282
        %v475 = vunpack.c.l.b16 %v283
        %v476 = vunpack.c.h.b16 %v283
        %v477 = vunpack.c.l.b16 %v284
        %v478 = vunpack.c.h.b16 %v284
        %v479 = vunpack.c.l.b16 %v285
        %v480 = vunpack.c.h.b16 %v285
        %v481 = vunpack.c.l.b16 %v286
        %v482 = vunpack.c.h.b16 %v286
        %v483 = vunpack.c.l.b16 %v287
        %v484 = vunpack.c.h.b16 %v287
        %v485 = vunpack.c.l.b16 %v288
        %v486 = vunpack.c.h.b16 %v288
        %v487 = vunpack.c.l.b16 %v289
        %v488 = vunpack.c.h.b16 %v289
        %v489 = vunpack.c.l.b16 %v290
        %v490 = vunpack.c.h.b16 %v290
        %v491 = vunpack.c.l.b16 %v291
        %v492 = vunpack.c.h.b16 %v291
        %v493 = vunpack.c.l.b16 %v292
        %v494 = vunpack.c.h.b16 %v292
        %v495 = vunpack.c.l.b16 %v293
        %v496 = vunpack.c.h.b16 %v293
        %v497 = vunpack.c.l.b16 %v294
        %v498 = vunpack.c.h.b16 %v294
        %v499 = vunpack.c.l.b16 %v295
        %v500 = vunpack.c.h.b16 %v295
        %v501 = vunpack.c.l.b16 %v296
        %v502 = vunpack.c.h.b16 %v296
        %v503 = vunpack.c.l.b16 %v297
        %v504 = vunpack.c.h.b16 %v297
        %v505 = vunpack.c.l.b16 %v298
        %v506 = vunpack.c.h.b16 %v298
        %v507 = vunpack.c.l.b16 %v299
        %v508 = vunpack.c.h.b16 %v299
        %v509 = vunpack.c.l.b16 %v300
        %v510 = vunpack.c.h.b16 %v300
        %v511 = vunpack.c.l.b16 %v301
        %v512 = vunpack.c.h.b16 %v301
        %v513 = vunpack.c.l.b16 %v302
        %v514 = vunpack.c.h.b16 %v302
        %v515 = vunpack.c.l.b16 %v303
        %v516 = vunpack.c.h.b16 %v303
        %v517 = vunpack.c.l.b16 %v304
        %v518 = vunpack.c.h.b16 %v304
        %v519 = vunpack.c.l.b16 %v305
        %v520 = vunpack.c.h.b16 %v305
        %v521 = vunpack.c.l.b16 %v306
        %v522 = vunpack.c.h.b16 %v306
        %v523 = vunpack.c.l.b16 %v307
        %v524 = vunpack.c.h.b16 %v307
        %v525 = vunpack.c.l.b16 %v308
        %v526 = vunpack.c.h.b16 %v308
        %v527 = vunpack.c.l.b16 %v309
        %v528 = vunpack.c.h.b16 %v309
        %v529 = vunpack.c.l.b16 %v310
        %v530 = vunpack.c.h.b16 %v310
        %v531 = vunpack.c.l.b16 %v311
        %v532 = vunpack.c.h.b16 %v311
        %v533 = vunpack.c.l.b16 %v312
        %v534 = vunpack.c.h.b16 %v312
        %v535 = vpack.c.b16 %v473, %v471
        %v536 = vpack.c.b16 %v474, %v472
        %v537 = vpack.c.b16 %v477, %v475
        %v538 = vpack.c.b16 %v478, %v476
        %v539 = vpack.c.b16 %v481, %v479
        %v540 = vpack.c.b16 %v482, %v480
        %v541 = vpack.c.b16 %v485, %v483
        %v542 = vpack.c.b16 %v486, %v484
        %v543 = vpack.c.b16 %v489, %v487
        %v544 = vpack.c.b16 %v490, %v488
        %v545 = vpack.c.b16 %v493, %v491
        %v546 = vpack.c.b16 %v494, %v492
        %v547 = vpack.c.b16 %v497, %v495
        %v548 = vpack.c.b16 %v498, %v496
        %v549 = vpack.c.b16 %v501, %v499
        %v550 = vpack.c.b16 %v502, %v500
        %v551 = vpack.c.b16 %v505, %v503
        %v552 = vpack.c.b16 %v506, %v504
        %v553 = vpack.c.b16 %v509, %v507
        %v554 = vpack.c.b16 %v510, %v508
        %v555 = vpack.c.b16 %v513, %v511
        %v556 = vpack.c.b16 %v514, %v512
        %v557 = vpack.c.b16 %v517, %v515
        %v558 = vpack.c.b16 %v518, %v516
        %v559 = vpack.c.b16 %v521, %v519
        %v560 = vpack.c.b16 %v522, %v520
        %v561 = vpack.c.b16 %v525, %v523
        %v562 = vpack.c.b16 %v526, %v524
        %v563 = vpack.c.b16 %v529, %v527
        %v564 = vpack.c.b16 %v530, %v528
        %v565 = vpack.c.b16 %v533, %v531
        %v566 = vpack.c.b16 %v534, %v532
        %599 = vmatpush.bf16.msra.mxu0 %v549
        %600 = vmatpush.bf16.msra.mxu0 %v547
        %601 = vmatpush.bf16.msra.mxu0 %v545
        %602 = vmatpush.bf16.msra.mxu0 %v543
        %603 = vmatpush.bf16.msra.mxu0 %v541
        %604 = vmatpush.bf16.msra.mxu0 %v539
        %605 = vmatpush.bf16.msra.mxu0 %v537
        %606 = vmatpush.bf16.msra.mxu0 %v535
        %607 = vmatmul.bf16.gmra.mxu0 %v391
        %v608 = vpop.f32.mrf.mxu0
        %v609 = vadd.f32 %v315, %v608
        %v610 = vpop.f32.mrf.mxu0
        %v611 = vadd.f32 %v315, %v610
        %612 = vmatmul.bf16.gmra.mxu0 %v393
        %v613 = vpop.f32.mrf.mxu0
        %v614 = vadd.f32 %v315, %v613
        %v615 = vpop.f32.mrf.mxu0
        %v616 = vadd.f32 %v315, %v615
        %617 = vmatmul.bf16.gmra.mxu0 %v395
        %v618 = vpop.f32.mrf.mxu0
        %v619 = vadd.f32 %v315, %v618
        %v620 = vpop.f32.mrf.mxu0
        %v621 = vadd.f32 %v315, %v620
        %622 = vmatmul.bf16.gmra.mxu0 %v397
        %v623 = vpop.f32.mrf.mxu0
        %v624 = vadd.f32 %v315, %v623
        %v625 = vpop.f32.mrf.mxu0
        %v626 = vadd.f32 %v315, %v625
        %627 = vmatmul.bf16.gmra.mxu0 %v399
        %v628 = vpop.f32.mrf.mxu0
        %v629 = vadd.f32 %v315, %v628
        %v630 = vpop.f32.mrf.mxu0
        %v631 = vadd.f32 %v315, %v630
        %632 = vmatmul.bf16.gmra.mxu0 %v401
        %v633 = vpop.f32.mrf.mxu0
        %v634 = vadd.f32 %v315, %v633
        %v635 = vpop.f32.mrf.mxu0
        %v636 = vadd.f32 %v315, %v635
        %637 = vmatmul.bf16.gmra.mxu0 %v403
        %v638 = vpop.f32.mrf.mxu0
        %v639 = vadd.f32 %v315, %v638
        %v640 = vpop.f32.mrf.mxu0
        %v641 = vadd.f32 %v315, %v640
        %642 = vmatmul.bf16.gmra.mxu0 %v405
        %v643 = vpop.f32.mrf.mxu0
        %v644 = vadd.f32 %v315, %v643
        %v645 = vpop.f32.mrf.mxu0
        %v646 = vadd.f32 %v315, %v645
        %647 = vmatmul.bf16.gmra.mxu0 %v407
        %v648 = vpop.f32.mrf.mxu0
        %v649 = vadd.f32 %v315, %v648
        %v650 = vpop.f32.mrf.mxu0
        %v651 = vadd.f32 %v315, %v650
        %652 = vmatmul.bf16.gmra.mxu0 %v409
        %v653 = vpop.f32.mrf.mxu0
        %v654 = vadd.f32 %v315, %v653
        %v655 = vpop.f32.mrf.mxu0
        %v656 = vadd.f32 %v315, %v655
        %657 = vmatmul.bf16.gmra.mxu0 %v411
        %v658 = vpop.f32.mrf.mxu0
        %v659 = vadd.f32 %v315, %v658
        %v660 = vpop.f32.mrf.mxu0
        %v661 = vadd.f32 %v315, %v660
        %662 = vmatmul.bf16.gmra.mxu0 %v413
        %v663 = vpop.f32.mrf.mxu0
        %v664 = vadd.f32 %v315, %v663
        %v665 = vpop.f32.mrf.mxu0
        %v666 = vadd.f32 %v315, %v665
        %667 = vdwg.mxu0
        %668 = vmatpush.bf16.msra.mxu0 %v565
        %669 = vmatpush.bf16.msra.mxu0 %v563
        %670 = vmatpush.bf16.msra.mxu0 %v561
        %671 = vmatpush.bf16.msra.mxu0 %v559
        %672 = vmatpush.bf16.msra.mxu0 %v557
        %673 = vmatpush.bf16.msra.mxu0 %v555
        %674 = vmatpush.bf16.msra.mxu0 %v553
        %675 = vmatpush.bf16.msra.mxu0 %v551
        %676 = vmatmul.bf16.gmra.mxu0 %v392
        %v677 = vpop.f32.mrf.mxu0
        %v678 = vadd.f32 %v609, %v677
        %v679 = vpop.f32.mrf.mxu0
        %v680 = vadd.f32 %v611, %v679
        %681 = vmatmul.bf16.gmra.mxu0 %v394
        %v682 = vpop.f32.mrf.mxu0
        %v683 = vadd.f32 %v614, %v682
        %v684 = vpop.f32.mrf.mxu0
        %v685 = vadd.f32 %v616, %v684
        %686 = vmatmul.bf16.gmra.mxu0 %v396
        %v687 = vpop.f32.mrf.mxu0
        %v688 = vadd.f32 %v619, %v687
        %v689 = vpop.f32.mrf.mxu0
        %v690 = vadd.f32 %v621, %v689
        %691 = vmatmul.bf16.gmra.mxu0 %v398
        %v692 = vpop.f32.mrf.mxu0
        %v693 = vadd.f32 %v624, %v692
        %v694 = vpop.f32.mrf.mxu0
        %v695 = vadd.f32 %v626, %v694
        %696 = vmatmul.bf16.gmra.mxu0 %v400
        %v697 = vpop.f32.mrf.mxu0
        %v698 = vadd.f32 %v629, %v697
        %v699 = vpop.f32.mrf.mxu0
        %v700 = vadd.f32 %v631, %v699
        %701 = vmatmul.bf16.gmra.mxu0 %v402
        %v702 = vpop.f32.mrf.mxu0
        %v703 = vadd.f32 %v634, %v702
        %v704 = vpop.f32.mrf.mxu0
        %v705 = vadd.f32 %v636, %v704
        %706 = vmatmul.bf16.gmra.mxu0 %v404
        %v707 = vpop.f32.mrf.mxu0
        %v708 = vadd.f32 %v639, %v707
        %v709 = vpop.f32.mrf.mxu0
        %v710 = vadd.f32 %v641, %v709
        %711 = vmatmul.bf16.gmra.mxu0 %v406
        %v712 = vpop.f32.mrf.mxu0
        %v713 = vadd.f32 %v644, %v712
        %v714 = vpop.f32.mrf.mxu0
        %v715 = vadd.f32 %v646, %v714
        %716 = vmatmul.bf16.gmra.mxu0 %v408
        %v717 = vpop.f32.mrf.mxu0
        %v718 = vadd.f32 %v649, %v717
        %v719 = vpop.f32.mrf.mxu0
        %v720 = vadd.f32 %v651, %v719
        %721 = vmatmul.bf16.gmra.mxu0 %v410
        %v722 = vpop.f32.mrf.mxu0
        %v723 = vadd.f32 %v654, %v722
        %v724 = vpop.f32.mrf.mxu0
        %v725 = vadd.f32 %v656, %v724
        %726 = vmatmul.bf16.gmra.mxu0 %v412
        %v727 = vpop.f32.mrf.mxu0
        %v728 = vadd.f32 %v659, %v727
        %v729 = vpop.f32.mrf.mxu0
        %v730 = vadd.f32 %v661, %v729
        %731 = vmatmul.bf16.gmra.mxu0 %v414
        %v732 = vpop.f32.mrf.mxu0
        %v733 = vadd.f32 %v664, %v732
        %v734 = vpop.f32.mrf.mxu0
        %v735 = vadd.f32 %v666, %v734
        %736 = vdwg.mxu0
        %737 = vmatpush.bf16.msra.mxu0 %v550
        %738 = vmatpush.bf16.msra.mxu0 %v548
        %739 = vmatpush.bf16.msra.mxu0 %v546
        %740 = vmatpush.bf16.msra.mxu0 %v544
        %741 = vmatpush.bf16.msra.mxu0 %v542
        %742 = vmatpush.bf16.msra.mxu0 %v540
        %743 = vmatpush.bf16.msra.mxu0 %v538
        %744 = vmatpush.bf16.msra.mxu0 %v536
        %745 = vmatmul.bf16.gmra.mxu0 %v391
        %v746 = vpop.f32.mrf.mxu0
        %v747 = vadd.f32 %v316, %v746
        %v748 = vpop.f32.mrf.mxu0
        %v749 = vadd.f32 %v316, %v748
        %750 = vmatmul.bf16.gmra.mxu0 %v393
        %v751 = vpop.f32.mrf.mxu0
        %v752 = vadd.f32 %v316, %v751
        %v753 = vpop.f32.mrf.mxu0
        %v754 = vadd.f32 %v316, %v753
        %755 = vmatmul.bf16.gmra.mxu0 %v395
        %v756 = vpop.f32.mrf.mxu0
        %v757 = vadd.f32 %v316, %v756
        %v758 = vpop.f32.mrf.mxu0
        %v759 = vadd.f32 %v316, %v758
        %760 = vmatmul.bf16.gmra.mxu0 %v397
        %v761 = vpop.f32.mrf.mxu0
        %v762 = vadd.f32 %v316, %v761
        %v763 = vpop.f32.mrf.mxu0
        %v764 = vadd.f32 %v316, %v763
        %765 = vmatmul.bf16.gmra.mxu0 %v399
        %v766 = vpop.f32.mrf.mxu0
        %v767 = vadd.f32 %v316, %v766
        %v768 = vpop.f32.mrf.mxu0
        %v769 = vadd.f32 %v316, %v768
        %770 = vmatmul.bf16.gmra.mxu0 %v401
        %v771 = vpop.f32.mrf.mxu0
        %v772 = vadd.f32 %v316, %v771
        %v773 = vpop.f32.mrf.mxu0
        %v774 = vadd.f32 %v316, %v773
        %775 = vmatmul.bf16.gmra.mxu0 %v403
        %v776 = vpop.f32.mrf.mxu0
        %v777 = vadd.f32 %v316, %v776
        %v778 = vpop.f32.mrf.mxu0
        %v779 = vadd.f32 %v316, %v778
        %780 = vmatmul.bf16.gmra.mxu0 %v405
        %v781 = vpop.f32.mrf.mxu0
        %v782 = vadd.f32 %v316, %v781
        %v783 = vpop.f32.mrf.mxu0
        %v784 = vadd.f32 %v316, %v783
        %785 = vmatmul.bf16.gmra.mxu0 %v407
        %v786 = vpop.f32.mrf.mxu0
        %v787 = vadd.f32 %v316, %v786
        %v788 = vpop.f32.mrf.mxu0
        %v789 = vadd.f32 %v316, %v788
        %790 = vmatmul.bf16.gmra.mxu0 %v409
        %v791 = vpop.f32.mrf.mxu0
        %v792 = vadd.f32 %v316, %v791
        %v793 = vpop.f32.mrf.mxu0
        %v794 = vadd.f32 %v316, %v793
        %795 = vmatmul.bf16.gmra.mxu0 %v411
        %v796 = vpop.f32.mrf.mxu0
        %v797 = vadd.f32 %v316, %v796
        %v798 = vpop.f32.mrf.mxu0
        %v799 = vadd.f32 %v316, %v798
        %800 = vmatmul.bf16.gmra.mxu0 %v413
        %v801 = vpop.f32.mrf.mxu0
        %v802 = vadd.f32 %v316, %v801
        %v803 = vpop.f32.mrf.mxu0
        %v804 = vadd.f32 %v316, %v803
        %805 = vdwg.mxu0
        %806 = vmatpush.bf16.msra.mxu0 %v566
        %807 = vmatpush.bf16.msra.mxu0 %v564
        %808 = vmatpush.bf16.msra.mxu0 %v562
        %809 = vmatpush.bf16.msra.mxu0 %v560
        %810 = vmatpush.bf16.msra.mxu0 %v558
        %811 = vmatpush.bf16.msra.mxu0 %v556
        %812 = vmatpush.bf16.msra.mxu0 %v554
        %813 = vmatpush.bf16.msra.mxu0 %v552
        %814 = vmatmul.bf16.gmra.mxu0 %v392
        %v815 = vpop.f32.mrf.mxu0
        %v816 = vadd.f32 %v747, %v815
        %v817 = vpop.f32.mrf.mxu0
        %v818 = vadd.f32 %v749, %v817
        %819 = vmatmul.bf16.gmra.mxu0 %v394
        %v820 = vpop.f32.mrf.mxu0
        %v821 = vadd.f32 %v752, %v820
        %v822 = vpop.f32.mrf.mxu0
        %v823 = vadd.f32 %v754, %v822
        %824 = vmatmul.bf16.gmra.mxu0 %v396
        %v825 = vpop.f32.mrf.mxu0
        %v826 = vadd.f32 %v757, %v825
        %v827 = vpop.f32.mrf.mxu0
        %v828 = vadd.f32 %v759, %v827
        %829 = vmatmul.bf16.gmra.mxu0 %v398
        %v830 = vpop.f32.mrf.mxu0
        %v831 = vadd.f32 %v762, %v830
        %v832 = vpop.f32.mrf.mxu0
        %v833 = vadd.f32 %v764, %v832
        %834 = vmatmul.bf16.gmra.mxu0 %v400
        %v835 = vpop.f32.mrf.mxu0
        %v836 = vadd.f32 %v767, %v835
        %v837 = vpop.f32.mrf.mxu0
        %v838 = vadd.f32 %v769, %v837
        %839 = vmatmul.bf16.gmra.mxu0 %v402
        %v840 = vpop.f32.mrf.mxu0
        %v841 = vadd.f32 %v772, %v840
        %v842 = vpop.f32.mrf.mxu0
        %v843 = vadd.f32 %v774, %v842
        %844 = vmatmul.bf16.gmra.mxu0 %v404
        %v845 = vpop.f32.mrf.mxu0
        %v846 = vadd.f32 %v777, %v845
        %v847 = vpop.f32.mrf.mxu0
        %v848 = vadd.f32 %v779, %v847
        %849 = vmatmul.bf16.gmra.mxu0 %v406
        %v850 = vpop.f32.mrf.mxu0
        %v851 = vadd.f32 %v782, %v850
        %v852 = vpop.f32.mrf.mxu0
        %v853 = vadd.f32 %v784, %v852
        %854 = vmatmul.bf16.gmra.mxu0 %v408
        %v855 = vpop.f32.mrf.mxu0
        %v856 = vadd.f32 %v787, %v855
        %v857 = vpop.f32.mrf.mxu0
        %v858 = vadd.f32 %v789, %v857
        %859 = vmatmul.bf16.gmra.mxu0 %v410
        %v860 = vpop.f32.mrf.mxu0
        %v861 = vadd.f32 %v792, %v860
        %v862 = vpop.f32.mrf.mxu0
        %v863 = vadd.f32 %v794, %v862
        %864 = vmatmul.bf16.gmra.mxu0 %v412
        %v865 = vpop.f32.mrf.mxu0
        %v866 = vadd.f32 %v797, %v865
        %v867 = vpop.f32.mrf.mxu0
        %v868 = vadd.f32 %v799, %v867
        %869 = vmatmul.bf16.gmra.mxu0 %v414
        %v870 = vpop.f32.mrf.mxu0
        %v871 = vadd.f32 %v802, %v870
        %v872 = vpop.f32.mrf.mxu0
        %v873 = vadd.f32 %v804, %v872
        %874 = vdwg.mxu0
        %875 = vst [vmem:[%s251] sm:$0xff] %v678
        %876 = vst [vmem:[%s251 + $0x8] sm:$0xff] %v816
        %877 = vst [vmem:[%s251 + $0x10] sm:$0xff] %v680
        %878 = vst [vmem:[%s251 + $0x18] sm:$0xff] %v818
        %879 = vst [vmem:[%s251 + $0x20] sm:$0xff] %v683
        %880 = vst [vmem:[%s251 + $0x28] sm:$0xff] %v821
        %881 = vst [vmem:[%s251 + $0x30] sm:$0xff] %v685
        %882 = vst [vmem:[%s251 + $0x38] sm:$0xff] %v823
        %883 = vst [vmem:[%s251 + $0x40] sm:$0xff] %v688
        %884 = vst [vmem:[%s251 + $0x48] sm:$0xff] %v826
        %885 = vst [vmem:[%s251 + $0x50] sm:$0xff] %v690
        %886 = vst [vmem:[%s251 + $0x58] sm:$0xff] %v828
        %887 = vst [vmem:[%s251 + $0x60] sm:$0xff] %v693
        %888 = vst [vmem:[%s251 + $0x68] sm:$0xff] %v831
        %889 = vst [vmem:[%s251 + $0x70] sm:$0xff] %v695
        %890 = vst [vmem:[%s251 + $0x78] sm:$0xff] %v833
        %891 = vst [vmem:[%s251 + $0x80] sm:$0xff] %v698
        %892 = vst [vmem:[%s251 + $0x88] sm:$0xff] %v836
        %893 = vst [vmem:[%s251 + $0x90] sm:$0xff] %v700
        %894 = vst [vmem:[%s251 + $0x98] sm:$0xff] %v838
        %895 = vst [vmem:[%s251 + $0xa0] sm:$0xff] %v703
        %896 = vst [vmem:[%s251 + $0xa8] sm:$0xff] %v841
        %897 = vst [vmem:[%s251 + $0xb0] sm:$0xff] %v705
        %898 = vst [vmem:[%s251 + $0xb8] sm:$0xff] %v843
        %899 = vst [vmem:[%s251 + $0xc0] sm:$0xff] %v708
        %900 = vst [vmem:[%s251 + $0xc8] sm:$0xff] %v846
        %901 = vst [vmem:[%s251 + $0xd0] sm:$0xff] %v710
        %902 = vst [vmem:[%s251 + $0xd8] sm:$0xff] %v848
        %903 = vst [vmem:[%s251 + $0xe0] sm:$0xff] %v713
        %904 = vst [vmem:[%s251 + $0xe8] sm:$0xff] %v851
        %905 = vst [vmem:[%s251 + $0xf0] sm:$0xff] %v715
        %906 = vst [vmem:[%s251 + $0xf8] sm:$0xff] %v853
        %907 = vst [vmem:[%s251 + $0x100] sm:$0xff] %v718
        %908 = vst [vmem:[%s251 + $0x108] sm:$0xff] %v856
        %909 = vst [vmem:[%s251 + $0x110] sm:$0xff] %v720
        %910 = vst [vmem:[%s251 + $0x118] sm:$0xff] %v858
        %911 = vst [vmem:[%s251 + $0x120] sm:$0xff] %v723
        %912 = vst [vmem:[%s251 + $0x128] sm:$0xff] %v861
        %913 = vst [vmem:[%s251 + $0x130] sm:$0xff] %v725
        %914 = vst [vmem:[%s251 + $0x138] sm:$0xff] %v863
        %915 = vst [vmem:[%s251 + $0x140] sm:$0xff] %v728
        %916 = vst [vmem:[%s251 + $0x148] sm:$0xff] %v866
        %917 = vst [vmem:[%s251 + $0x150] sm:$0xff] %v730
        %918 = vst [vmem:[%s251 + $0x158] sm:$0xff] %v868
        %919 = vst [vmem:[%s251 + $0x160] sm:$0xff] %v733
        %920 = vst [vmem:[%s251 + $0x168] sm:$0xff] %v871
        %921 = vst [vmem:[%s251 + $0x170] sm:$0xff] %v735
        %922 = vst [vmem:[%s251 + $0x178] sm:$0xff] %v873
        %s923 = sand.u32 %s121, 1
        %s924 = scalar_lea.sflag [#allocation4], %s923
        %s925 = sand.u32 %s121, 1
        %s926 = smul.addr %s925, 384
        %s927 = scalar_lea.vmem [#allocation8], %s926
        // Predicated region
        $region45: #{tpu_custom_call.1} parent=31 // pred_check
          %p928 = pneg %p131
        $region46: #{tpu_custom_call.1} parent=31 // pred_check_branch
          %930 = sbr.rel (%p928) target = $region48
        $region47: #{tpu_custom_call.1} parent=31 // pred_region
          %s931 = smul.u32 24, %s26
          %s932 = smul.u32 2, %s25
          %934 = vsyncadd %s924, 0
          %s935 = smul.addr %s931, 2
          %s936 = sadd.s32 %s932, %s935
          %s937 = smul.addr %s936, 8
          %s938 = scalar_lea.hbm %s3, %s937
          %s939 = sshll.u32 %s927, 4
          %s940 = int_to_ptr.vmem [resolvable:$true] %s939
          %s941 = sshll.u32 %s938, 4
          %s942 = int_to_ptr.hbm [resolvable:$true] %s941
          %947 = dma.vmem_to_hbm [thread:$0]  %s940, 6144, %s942, %s924, 256, 256, 16
        $region48: #{tpu_custom_call.1} parent=31 // pred_fallthru
          _
      $region32: #{tpu_custom_call.1} parent=5 // pred_fallthru
        _
      %p948 = scmp.le.s32.totalorder 2, %s16
      // Predicated region
      $region49: #{tpu_custom_call.1} parent=5 // pred_check
        %p949 = pneg %p948
      $region50: #{tpu_custom_call.1} parent=5 // pred_check_branch
        %951 = sbr.rel (%p949) target = $region52
      $region51: #{tpu_custom_call.1} parent=5 // pred_region
        %s952 = ssub.s32 %s16, 2
        // Predicated region
        $region53: #{tpu_custom_call.1} parent=51 // pred_check
          %p953 = pneg %p137
        $region54: #{tpu_custom_call.1} parent=51 // pred_check_branch
          %955 = sbr.rel (%p953) target = $region56
        $region55: #{tpu_custom_call.1} parent=51 // pred_region
          %s956 = sand.u32 %s122, 1
          %s957 = scalar_lea.sflag [#allocation4], %s956
          %s958 = sand.u32 %s122, 1
          %s959 = smul.addr %s958, 384
          %s960 = scalar_lea.vmem [#allocation8], %s959
          %962 = dma.done %s957, 6144
        $region56: #{tpu_custom_call.1} parent=51 // pred_fallthru
          _
      $region52: #{tpu_custom_call.1} parent=5 // pred_fallthru
        _
    $region6: #{tpu_custom_call.1} parent=1 // loop_footer
      %s20 = sadd.s32 1, %s16
    $region7: #{tpu_custom_call.1} parent=1 // loop_footer_branch
      %15 = sbr.rel target = $region3
    $region8: #{tpu_custom_call.1} parent=1 // loop_exit
      _
    %963 = vsyncpa [#allocation3], 1
    %s964 = scalar_lea.sflag [#allocation3], 1
    %965 = vsyncpa %s964, 1
    %966 = vsyncpa [#allocation6], 1
    %967 = vsyncpa [#allocation4], 1
    %s968 = scalar_lea.sflag [#allocation4], 1
    %969 = vsyncpa %s968, 1

</llo_original>
